<compile_context>
chip_gen: v7x
topology: tpu7x:2x2x1
jax: 0.10.0
libtpu: 0.0.40
codegen_flags: <defaults>
</compile_context>

<pallas_src>
import math

import jax
import jax.numpy as jnp
from jax.experimental import pallas as pl
from jax.experimental.pallas import tpu as pltpu


def _round_up(x, m):
    return ((x + m - 1) // m) * m


_GELU_C = math.sqrt(2.0 / math.pi)


def _gelu_new(x):
    # HuggingFace / GPT "new" GELU (tanh approximation), matches the torch module.
    return 0.5 * x * (1.0 + jnp.tanh(_GELU_C * (x + 0.044715 * x * x * x)))


# ---------------------------------------------------------------------------
# Kernels
# ---------------------------------------------------------------------------
def _ffn_kernel_acc(x_ref, w1_ref, b1_ref, w2_ref, b2_ref, o_ref, acc_ref):
    # Used when the output dtype is not f32 (e.g. bf16): f32 VMEM accumulator.
    # x_ref: (tm, D)   w1_ref: (D, th)   b1_ref: (1, th)
    # w2_ref: (th, D)  b2_ref: (1, D)    o_ref: (tm, D)   acc_ref: (tm, D) f32
    j = pl.program_id(1)

    @pl.when(j == 0)
    def _init():
        # Fold b2 into the accumulator init (removes a (tm, D) add from the epilogue).
        acc_ref[...] = jnp.zeros_like(acc_ref) + b2_ref[...].astype(jnp.float32)

    h = jnp.dot(x_ref[...], w1_ref[...], preferred_element_type=jnp.float32)
    h = _gelu_new(h + b1_ref[...].astype(jnp.float32))
    acc_ref[...] += jnp.dot(h.astype(w2_ref.dtype), w2_ref[...],
                            preferred_element_type=jnp.float32)

    @pl.when(j == pl.num_programs(1) - 1)
    def _finalize():
        o_ref[...] = acc_ref[...].astype(o_ref.dtype)
    # TODO(synk): dropout omitted (module in eval / inference mode -> identity).


def _ffn_kernel_f32out(x_ref, w1_ref, b1_ref, w2_ref, b2_ref, o_ref):
    # f32 output: the output block index is constant along j, so it stays VMEM-resident
    # across the reduction -> accumulate directly into it; no scratch, no extra copy.
    j = pl.program_id(1)

    @pl.when(j == 0)
    def _init():
        o_ref[...] = jnp.zeros_like(o_ref) + b2_ref[...].astype(jnp.float32)

    h = jnp.dot(x_ref[...], w1_ref[...], preferred_element_type=jnp.float32)
    h = _gelu_new(h + b1_ref[...].astype(jnp.float32))
    o_ref[...] += jnp.dot(h.astype(w2_ref.dtype), w2_ref[...],
                          preferred_element_type=jnp.float32)
    # TODO(synk): dropout omitted (module in eval / inference mode -> identity).


# ---------------------------------------------------------------------------
# Hardware queries & tile selection
# ---------------------------------------------------------------------------
def _vmem_capacity_bytes():
    try:
        return int(pltpu.get_tpu_info().vmem_capacity_bytes)
    except Exception:
        return 64 << 20  # conservative fallback (v7x per-TensorCore)


def _num_tensorcores():
    try:
        return max(1, int(getattr(jax.devices()[0], "num_cores", 1) or 1))
    except Exception:
        return 1


def _estimate_vmem(tm, th, d_pad, x_is, w_is, out_is, use_acc):
    v = 2 * tm * d_pad * x_is                      # x blocks (double buffered)
    v += 2 * (d_pad * th + th) * w_is              # w1 + b1 blocks
    v += 2 * (th * d_pad + d_pad) * w_is           # w2 + b2 blocks
    v += 2 * tm * d_pad * out_is                   # output blocks
    if use_acc:
        v += tm * d_pad * 4                        # f32 accumulator scratch
    v += 2 * tm * th * 4                           # f32 GELU / matmul intermediate
    return v


def _pick_divisor(total, target, step):
    """Largest multiple of `step` that divides `total` and is <= max(target, step)."""
    target = max(target, step)
    best = step
    d = step
    while d <= min(target, total):
        if total % d == 0:
            best = d
        d += step
    return best


def _select_tiles(M, d_pad, h_pad, x_is, w_is, out_is, use_acc,
                  vmem_budget, n_cores, tm=None, th=None):
    m_ceil = _round_up(max(M, 1), 8)
    m_cap = m_ceil
    if n_cores > 1 and m_ceil > 8:
        # Make sure the "parallel" M axis has >= n_cores blocks (megacore split, v7x).
        m_cap = _round_up(-(-m_ceil // n_cores), 8)

    if tm is not None:
        tm_cands = [max(8, min(_round_up(tm, 8), m_cap))]
    else:
        tm_cands = [t for t in (2048, 1024, 512, 256, 128, 64, 32, 16, 8) if t <= m_cap]
        if not tm_cands:
            tm_cands = [m_cap]

    h_step = 256 if (h_pad % 256 == 0) else 128   # 256-aligned chunks for v6e/v7x MXU
    if th is not None:
        th_cands = [_pick_divisor(h_pad, min(th, h_pad), 128)]
    else:
        th_cands = []
        for t in (h_pad, 4096, 2048, 1024, 512, 256):
            d = _pick_divisor(h_pad, t, h_step)
            if d not in th_cands:
                th_cands.append(d)
        th_cands.sort(reverse=True)

    def est(tm_, th_):
        return _estimate_vmem(tm_, th_, d_pad, x_is, w_is, out_is, use_acc)

    pick = None
    # 1) Full-H residency: W1/W2 block index constant -> weights DMA'd exactly once.
    if th_cands[0] == h_pad:
        for tm_ in tm_cands:
            if est(tm_, h_pad) <= vmem_budget:
                pick = (tm_, h_pad)
                break
    # 2) Otherwise maximize the token tile first (weight traffic ~ grid_m), then th.
    if pick is None:
        for tm_ in tm_cands:
            hit = None
            for th_ in th_cands:
                if est(tm_, th_) <= vmem_budget:
                    hit = (tm_, th_)
                    break
            if hit is not None:
                pick = hit
                break
    if pick is None:
        pick = (tm_cands[-1], th_cands[-1])

    tm_eff, th_eff = pick
    # Balance M tiles so the last tile is not mostly padding.
    n_m = -(-m_ceil // tm_eff)
    tm_eff = max(8, _round_up(-(-m_ceil // n_m), 8))
    return tm_eff, th_eff


# ---------------------------------------------------------------------------
# Parameter preparation (hoisted out of the per-call path) and forward pass
# ---------------------------------------------------------------------------
def pad_ffn_params(w1, b1, w2, b2):
    """Pad the FFN parameters to TPU-friendly shapes ONCE.

    w1: (dims, hidden), b1: (hidden,), w2: (hidden, dims), b2: (dims,).
    Returns ((w1p, b1p, w2p, b2p), (dims, hidden)).  Zero padding is exact:
    padded x cols x padded w1 rows contribute 0, padded hidden cols give gelu(0)=0
    against zero w2 rows, padded output cols are sliced off.
    """
    dims, hidden = w1.shape
    d_pad = _round_up(dims, 128)
    h_pad = _round_up(hidden, 256)
    if d_pad != dims or h_pad != hidden:
        w1 = jnp.pad(w1, ((0, d_pad - dims), (0, h_pad - hidden)))
        b1 = jnp.pad(b1, (0, h_pad - hidden))
        w2 = jnp.pad(w2, ((0, h_pad - hidden), (0, d_pad - dims)))
        b2 = jnp.pad(b2, (0, d_pad - dims))
    return (w1, b1.reshape(1, h_pad), w2, b2.reshape(1, d_pad)), (dims, hidden)


def positionwise_feed_forward(x, padded_params, dims_hidden, *, tm=None, th=None):
    """x: (..., dims); padded_params / dims_hidden from pad_ffn_params()."""
    w1p, b1p, w2p, b2p = padded_params
    dims, hidden = dims_hidden
    orig_shape = x.shape
    assert orig_shape[-1] == dims, (orig_shape, dims)

    d_pad, h_pad = w1p.shape
    xm = x.reshape(-1, dims)
    M = xm.shape[0]

    out_dtype = x.dtype
    use_acc = out_dtype != jnp.float32
    x_is = jnp.dtype(x.dtype).itemsize
    w_is = jnp.dtype(w1p.dtype).itemsize
    out_is = jnp.dtype(out_dtype).itemsize

    vmem_cap = _vmem_capacity_bytes()
    vmem_budget = int(vmem_cap * 0.75)          # headroom for compiler scratch/spill
    n_cores = _num_tensorcores()

    tm_eff, th_eff = _select_tiles(M, d_pad, h_pad, x_is, w_is, out_is, use_acc,
                                   vmem_budget, n_cores, tm=tm, th=th)

    m_pad = _round_up(max(M, 1), tm_eff)
    if m_pad != M or d_pad != dims:
        xp = jnp.pad(xm, ((0, m_pad - M), (0, d_pad - dims)))
    else:
        xp = xm

    grid = (m_pad // tm_eff, h_pad // th_eff)
    weights_resident = th_eff == h_pad

    est = _estimate_vmem(tm_eff, th_eff, d_pad, x_is, w_is, out_is, use_acc)
    vmem_limit = int(min(vmem_cap, max(32 << 20, est + (12 << 20))))

    weight_passes = 1 if weights_resident else grid[0]
    cost = pl.CostEstimate(
        flops=4 * M * dims * hidden,
        transcendentals=M * hidden,
        bytes_accessed=(M * dims) * (x_is + out_is)
                       + weight_passes * 2 * d_pad * h_pad * w_is,
    )

    kernel = _ffn_kernel_acc if use_acc else _ffn_kernel_f32out
    scratch = [pltpu.VMEM((tm_eff, d_pad), jnp.float32)] if use_acc else []

    out = pl.pallas_call(
        kernel,
        out_shape=jax.ShapeDtypeStruct((m_pad, d_pad), out_dtype),
        grid_spec=pltpu.PrefetchScalarGridSpec(
            num_scalar_prefetch=0,
            grid=grid,
            in_specs=[
                pl.BlockSpec((tm_eff, d_pad), lambda i, j: (i, 0)),   # x tile
                pl.BlockSpec((d_pad, th_eff), lambda i, j: (0, j)),   # w1 chunk
                pl.BlockSpec((1, th_eff), lambda i, j: (0, j)),       # b1 chunk
                pl.BlockSpec((th_eff, d_pad), lambda i, j: (j, 0)),   # w2 chunk
                pl.BlockSpec((1, d_pad), lambda i, j: (0, 0)),        # b2
            ],
            out_specs=pl.BlockSpec((tm_eff, d_pad), lambda i, j: (i, 0)),
            scratch_shapes=scratch,
        ),
        compiler_params=pltpu.CompilerParams(
            dimension_semantics=("parallel", "arbitrary"),
            vmem_limit_bytes=vmem_limit,
        ),
        cost_estimate=cost,
    )(xp, w1p, b1p, w2p, b2p)

    return out[:M, :dims].reshape(orig_shape)


def init_params(key, dims, rate=4, dtype=jnp.float32):
    """Deterministic init mimicking nn.Linear default (uniform +-1/sqrt(fan_in))."""
    hidden = dims * rate
    k1, k2, k3, k4 = jax.random.split(key, 4)
    bound1 = 1.0 / math.sqrt(dims)
    bound2 = 1.0 / math.sqrt(hidden)
    # stored as (in, out) so kernel computes x @ W (== x @ W_torch.T)
    w1 = jax.random.uniform(k1, (dims, hidden), dtype, -bound1, bound1)
    b1 = jax.random.uniform(k2, (hidden,), dtype, -bound1, bound1)
    w2 = jax.random.uniform(k3, (hidden, dims), dtype, -bound2, bound2)
    b2 = jax.random.uniform(k4, (dims,), dtype, -bound2, bound2)
    return w1, b1, w2, b2


if __name__ == "__main__":
    key = jax.random.PRNGKey(0)

    def reference(x, w1, b1, w2, b2, cast=None):
        f32 = jnp.float32
        xm = x.reshape(-1, x.shape[-1]).astype(f32)
        h = _gelu_new(xm @ w1.astype(f32) + b1.astype(f32))
        if cast is not None:
            h = h.astype(cast).astype(f32)
        out = xm.dtype  # placeholder to keep line count small
        out = h @ w2.astype(f32) + b2.astype(f32)
        return out.reshape(x.shape).astype(x.dtype)

    # 1) f32 baseline (small aligned-ish shape; dims padded 32 -> 128)
    batch, seq, dims, rate = 2, 8, 32, 4
    k1, k2, key = jax.random.split(key, 3)
    x = jax.random.normal(k1, (batch, seq, dims), jnp.float32)
    w1, b1, w2, b2 = init_params(k2, dims, rate)
    params, meta = pad_ffn_params(w1, b1, w2, b2)
    out = jax.block_until_ready(positionwise_feed_forward(x, params, meta))
    ref = reference(x, w1, b1, w2, b2)
    assert out.shape == x.shape
    assert jnp.allclose(out, ref, atol=1e-4, rtol=1e-4), \
        float(jnp.max(jnp.abs(out - ref)))

    # 2) bf16 path: ragged token count, unaligned dims/hidden, f32-accumulator kernel
    dims, rate = 40, 4
    k1, k2, key = jax.random.split(key, 3)
    x = jax.random.normal(k1, (3, 7, dims), jnp.float32).astype(jnp.bfloat16)
    w1, b1, w2, b2 = [p.astype(jnp.bfloat16) for p in init_params(k2, dims, rate)]
    params, meta = pad_ffn_params(w1, b1, w2, b2)
    out = jax.block_until_ready(positionwise_feed_forward(x, params, meta))
    ref = reference(x, w1, b1, w2, b2, cast=jnp.bfloat16)
    assert out.shape == x.shape and out.dtype == jnp.bfloat16
    err = float(jnp.max(jnp.abs(out.astype(jnp.float32) - ref.astype(jnp.float32))))
    assert err < 5e-2, err

    # 3) multi-chunk hidden reduction (h_pad > th) and multiple M tiles, f32
    dims, rate = 64, 8   # hidden = 512; forced th = 256 -> 2 reduction chunks
    k1, k2, key = jax.random.split(key, 3)
    x = jax.random.normal(k1, (2, 9, dims), jnp.float32)
    w1, b1, w2, b2 = init_params(k2, dims, rate)
    params, meta = pad_ffn_params(w1, b1, w2, b2)
    out = jax.block_until_ready(
        positionwise_feed_forward(x, params, meta, tm=8, th=256))
    ref = reference(x, w1, b1, w2, b2)
    assert jnp.allclose(out, ref, atol=1e-4, rtol=1e-4), \
        float(jnp.max(jnp.abs(out - ref)))

    print("KERNEL_OK")
</pallas_src>

<mosaic_0001>
module attributes {stable_mosaic.version = 11 : i64} {
  func.func @_ffn_kernel_f32out(%arg0: i32, %arg1: i32, %arg2: memref<16x128xf32, #tpu.memory_space<vmem>>, %arg3: memref<128x256xf32, #tpu.memory_space<vmem>>, %arg4: memref<1x256xf32, #tpu.memory_space<vmem>>, %arg5: memref<256x128xf32, #tpu.memory_space<vmem>>, %arg6: memref<1x128xf32, #tpu.memory_space<vmem>>, %arg7: memref<16x128xf32, #tpu.memory_space<vmem>>) attributes {dimension_semantics = [#tpu.dimension_semantics<parallel>, #tpu.dimension_semantics<arbitrary>], iteration_bounds = array<i64: 1, 1>, scalar_prefetch = 0 : i64, scratch_operands = 0 : i64, tpu.core_type = #tpu.core_type<tc>, window_params = [{transform_indices = @transform_0, window_bounds = array<i64: 16, 128>}, {transform_indices = @transform_1, window_bounds = array<i64: 128, 256>}, {transform_indices = @transform_2, window_bounds = array<i64: 1, 256>}, {transform_indices = @transform_3, window_bounds = array<i64: 256, 128>}, {pipeline_mode = #tpu.pipeline_mode<synchronous>, transform_indices = @transform_4, window_bounds = array<i64: 1, 128>}, {transform_indices = @transform_5, window_bounds = array<i64: 16, 128>}]} {
    %c0_i32 = arith.constant 0 : i32
    %0 = arith.cmpi eq, %arg1, %c0_i32 : i32
    %1 = arith.extui %0 : i1 to i32
    %c0_i32_0 = arith.constant 0 : i32
    %2 = arith.cmpi ne, %1, %c0_i32_0 : i32
    scf.if %2 {
      %cst_17 = arith.constant 0.000000e+00 : f32
      %27 = vector.broadcast %cst_17 : f32 to vector<16x128xf32>
      %c0_18 = arith.constant 0 : index
      %c0_19 = arith.constant 0 : index
      %28 = vector.load %arg6[%c0_18, %c0_19] : memref<1x128xf32, #tpu.memory_space<vmem>>, vector<1x128xf32>
      %29 = vector.broadcast %28 : vector<1x128xf32> to vector<16x128xf32>
      %30 = arith.addf %27, %29 : vector<16x128xf32>
      %c0_20 = arith.constant 0 : index
      %c0_21 = arith.constant 0 : index
      %31 = vector.load %arg7[%c0_20, %c0_21] : memref<16x128xf32, #tpu.memory_space<vmem>>, vector<16x128xf32>
      tpu.vector_store %arg7[%c0_20, %c0_21], %30 {strides = array<i32>} : memref<16x128xf32, #tpu.memory_space<vmem>>, vector<16x128xf32>,
    } else {
    }
    %c0 = arith.constant 0 : index
    %c0_1 = arith.constant 0 : index
    %3 = vector.load %arg2[%c0, %c0_1] : memref<16x128xf32, #tpu.memory_space<vmem>>, vector<16x128xf32>
    %c0_2 = arith.constant 0 : index
    %c0_3 = arith.constant 0 : index
    %4 = vector.load %arg3[%c0_2, %c0_3] : memref<128x256xf32, #tpu.memory_space<vmem>>, vector<128x256xf32>
    %cst = arith.constant dense<0.000000e+00> : vector<16x256xf32>
    %5 = tpu.matmul %3, %4, %cst {dimension_numbers = #tpu.dot_dimension_numbers<[1], [0], [0], [1], [0, 0, 1, 1], [], []>} : vector<16x128xf32>, vector<128x256xf32>, vector<16x256xf32> -> vector<16x256xf32>
    %c0_4 = arith.constant 0 : index
    %c0_5 = arith.constant 0 : index
    %6 = vector.load %arg4[%c0_4, %c0_5] : memref<1x256xf32, #tpu.memory_space<vmem>>, vector<1x256xf32>
    %7 = vector.broadcast %6 : vector<1x256xf32> to vector<16x256xf32>
    %8 = arith.addf %5, %7 : vector<16x256xf32>
    %cst_6 = arith.constant 5.000000e-01 : f32
    %9 = vector.broadcast %cst_6 : f32 to vector<16x256xf32>
    %10 = arith.mulf %9, %8 : vector<16x256xf32>
    %cst_7 = arith.constant 4.471500e-02 : f32
    %11 = vector.broadcast %cst_7 : f32 to vector<16x256xf32>
    %12 = arith.mulf %11, %8 : vector<16x256xf32>
    %13 = arith.mulf %12, %8 : vector<16x256xf32>
    %14 = arith.mulf %13, %8 : vector<16x256xf32>
    %15 = arith.addf %8, %14 : vector<16x256xf32>
    %cst_8 = arith.constant 0.797884583 : f32
    %16 = vector.broadcast %cst_8 : f32 to vector<16x256xf32>
    %17 = arith.mulf %16, %15 : vector<16x256xf32>
    %18 = math.tanh %17 : vector<16x256xf32>
    %cst_9 = arith.constant 1.000000e+00 : f32
    %19 = vector.broadcast %cst_9 : f32 to vector<16x256xf32>
    %20 = arith.addf %19, %18 : vector<16x256xf32>
    %21 = arith.mulf %10, %20 : vector<16x256xf32>
    %c0_10 = arith.constant 0 : index
    %c0_11 = arith.constant 0 : index
    %22 = vector.load %arg7[%c0_10, %c0_11] : memref<16x128xf32, #tpu.memory_space<vmem>>, vector<16x128xf32>
    %c0_12 = arith.constant 0 : index
    %c0_13 = arith.constant 0 : index
    %23 = vector.load %arg5[%c0_12, %c0_13] : memref<256x128xf32, #tpu.memory_space<vmem>>, vector<256x128xf32>
    %cst_14 = arith.constant dense<0.000000e+00> : vector<16x128xf32>
    %24 = tpu.matmul %21, %23, %cst_14 {dimension_numbers = #tpu.dot_dimension_numbers<[1], [0], [0], [1], [0, 0, 1, 1], [], []>} : vector<16x256xf32>, vector<256x128xf32>, vector<16x128xf32> -> vector<16x128xf32>
    %25 = arith.addf %22, %24 : vector<16x128xf32>
    %c0_15 = arith.constant 0 : index
    %c0_16 = arith.constant 0 : index
    %26 = vector.load %arg7[%c0_15, %c0_16] : memref<16x128xf32, #tpu.memory_space<vmem>>, vector<16x128xf32>
    tpu.vector_store %arg7[%c0_15, %c0_16], %25 {strides = array<i32>} : memref<16x128xf32, #tpu.memory_space<vmem>>, vector<16x128xf32>,
    return
  }
  func.func @transform_0(%arg0: i32, %arg1: i32) -> (i32, i32) {
    %c0_i32 = arith.constant 0 : i32
    %c0_i32_0 = arith.constant 0 : i32
    return %arg0, %c0_i32 : i32, i32
  }
  func.func @transform_1(%arg0: i32, %arg1: i32) -> (i32, i32) {
    %c0_i32 = arith.constant 0 : i32
    %c0_i32_0 = arith.constant 0 : i32
    return %c0_i32, %arg1 : i32, i32
  }
  func.func @transform_2(%arg0: i32, %arg1: i32) -> (i32, i32) {
    %c0_i32 = arith.constant 0 : i32
    %c0_i32_0 = arith.constant 0 : i32
    return %c0_i32, %arg1 : i32, i32
  }
  func.func @transform_3(%arg0: i32, %arg1: i32) -> (i32, i32) {
    %c0_i32 = arith.constant 0 : i32
    %c0_i32_0 = arith.constant 0 : i32
    return %arg1, %c0_i32 : i32, i32
  }
  func.func @transform_4(%arg0: i32, %arg1: i32) -> (i32, i32) {
    %c0_i32 = arith.constant 0 : i32
    %c0_i32_0 = arith.constant 0 : i32
    %c0_i32_1 = arith.constant 0 : i32
    return %c0_i32, %c0_i32_0 : i32, i32
  }
  func.func @transform_5(%arg0: i32, %arg1: i32) -> (i32, i32) {
    %c0_i32 = arith.constant 0 : i32
    %c0_i32_0 = arith.constant 0 : i32
    return %arg0, %c0_i32 : i32, i32
  }
}

</mosaic_0001>

<llo_original>
// kernel: tpu_custom_call.1
$region0: #{tpu_custom_call.1}
  #allocation0 [shape = 'u32[]', space=smem, size = 0x4, offset = 0x4, fixed_abs, tag = 'smem constant byte address 0x4 - core index']
  #allocation1 [shape = 'u32[144,128]{1,0:T(1,128)}', space=vmem, size = 0x12000, scoped, tag = 'internal scratch']
  %s0 = inlined_call_operand.hbm [shape: f32[16,128], index: 0, kind: input, shape index: {}]
  %s1 = inlined_call_operand.hbm [shape: f32[128,256], index: 1, kind: input, shape index: {}]
  %s2 = inlined_call_operand.vmem [shape: f32[1,256], index: 2, kind: input, shape index: {}]
  %s3 = inlined_call_operand.hbm [shape: f32[256,128], index: 3, kind: input, shape index: {}]
  %s4 = inlined_call_operand.vmem [shape: f32[1,128], index: 4, kind: input, shape index: {}]
  %s5 = inlined_call_operand.hbm [shape: f32[16,128], index: 5, kind: output, shape index: {}]
  %s6 = sld [smem:[#allocation0]]
  $region46: #{tpu_custom_call.1} parent=0
    _
  %s8 = ssub.s32 1, %s6
  %s9 = scalar_select 0, %s8, %s6
  $region1: #{tpu_custom_call.1} parent=0
    #allocation2 [shape = 'u8[8192]{0}', space=vmem, size = 0x2000, scoped, tag = 'input window, operand 0, single buffered']
    #allocation3 [shape = 's32[1]{0}', space=sflag, size = 0x4, scoped, tag = 'scoped memory for tpu_custom_call.1']
    #allocation4 [shape = 's32[1]{0}', space=sflag, size = 0x4, scoped, tag = 'scoped memory for tpu_custom_call.1']
    #allocation5 [shape = 'u8[131072]{0}', space=vmem, size = 0x20000, scoped, tag = 'input window, operand 1, single buffered']
    #allocation6 [shape = 's32[1]{0}', space=sflag, size = 0x4, scoped, tag = 'scoped memory for tpu_custom_call.1']
    #allocation7 [shape = 'u8[131072]{0}', space=vmem, size = 0x20000, scoped, tag = 'input window, operand 3, single buffered']
    #allocation8 [shape = 'u8[8192]{0}', space=vmem, size = 0x2000, scoped, tag = 'output window, operand 0, single buffered']
    %10 = vsyncpa [#allocation3], 0
    %11 = vsyncpa [#allocation6], 0
    %12 = vsyncpa [#allocation4], 0
    // Predicated region
    $region2: #{tpu_custom_call.1} parent=1 // pred_check
      _
    $region3: #{tpu_custom_call.1} parent=1 // pred_check_branch
      %14 = sbr.rel (0) target = $region5
    $region4: #{tpu_custom_call.1} parent=1 // pred_region
      %s16 = ssub.s32 256, 256
      %17 = vsyncadd [#allocation3], %s16
      %s18 = sshll.u32 [#allocation2], 4
      %s19 = int_to_ptr.vmem [resolvable:$true] %s18
      %24 = dma.hbm_to_vmem [thread:$0]  %s0, 256, %s19, [#allocation3], 128, 128, 8
    $region5: #{tpu_custom_call.1} parent=1 // pred_fallthru
      _
    // Predicated region
    $region6: #{tpu_custom_call.1} parent=1 // pred_check
      _
    $region7: #{tpu_custom_call.1} parent=1 // pred_check_branch
      %26 = sbr.rel (0) target = $region9
    $region8: #{tpu_custom_call.1} parent=1 // pred_region
      %s28 = ssub.s32 4096, 4096
      %29 = vsyncadd [#allocation6], %s28
      %s30 = sshll.u32 [#allocation5], 4
      %s31 = int_to_ptr.vmem [resolvable:$true] %s30
      %36 = dma.hbm_to_vmem [thread:$0]  %s1, 4096, %s31, [#allocation6], 256, 256, 16
    $region9: #{tpu_custom_call.1} parent=1 // pred_fallthru
      _
    // Predicated region
    $region10: #{tpu_custom_call.1} parent=1 // pred_check
      _
    $region11: #{tpu_custom_call.1} parent=1 // pred_check_branch
      %38 = sbr.rel (0) target = $region13
    $region12: #{tpu_custom_call.1} parent=1 // pred_region
      _
    $region13: #{tpu_custom_call.1} parent=1 // pred_fallthru
      _
    // Predicated region
    $region14: #{tpu_custom_call.1} parent=1 // pred_check
      _
    $region15: #{tpu_custom_call.1} parent=1 // pred_check_branch
      %40 = sbr.rel (0) target = $region17
    $region16: #{tpu_custom_call.1} parent=1 // pred_region
      %s42 = ssub.s32 4096, 4096
      %43 = vsyncadd [#allocation6], %s42
      %s44 = sshll.u32 [#allocation7], 4
      %s45 = int_to_ptr.vmem [resolvable:$true] %s44
      %50 = dma.hbm_to_vmem [thread:$0]  %s3, 4096, %s45, [#allocation6], 128, 128, 8
    $region17: #{tpu_custom_call.1} parent=1 // pred_fallthru
      _
    // Predicated region
    $region18: #{tpu_custom_call.1} parent=1 // pred_check
      _
    $region19: #{tpu_custom_call.1} parent=1 // pred_check_branch
      %52 = sbr.rel (0) target = $region21
    $region20: #{tpu_custom_call.1} parent=1 // pred_region
      _
    $region21: #{tpu_custom_call.1} parent=1 // pred_fallthru
      _
    // Predicated region
    $region22: #{tpu_custom_call.1} parent=1 // pred_check
      _
    $region23: #{tpu_custom_call.1} parent=1 // pred_check_branch
      %54 = sbr.rel (0) target = $region25
    $region24: #{tpu_custom_call.1} parent=1 // pred_region
      %55 = dma.done [#allocation3], 256
    $region25: #{tpu_custom_call.1} parent=1 // pred_fallthru
      _
    // Predicated region
    $region26: #{tpu_custom_call.1} parent=1 // pred_check
      _
    $region27: #{tpu_custom_call.1} parent=1 // pred_check_branch
      %57 = sbr.rel (0) target = $region29
    $region28: #{tpu_custom_call.1} parent=1 // pred_region
      %58 = dma.done [#allocation6], 4096
    $region29: #{tpu_custom_call.1} parent=1 // pred_fallthru
      _
    // Predicated region
    $region30: #{tpu_custom_call.1} parent=1 // pred_check
      _
    $region31: #{tpu_custom_call.1} parent=1 // pred_check_branch
      %60 = sbr.rel (0) target = $region33
    $region32: #{tpu_custom_call.1} parent=1 // pred_region
      %61 = dma.done [#allocation6], 4096
    $region33: #{tpu_custom_call.1} parent=1 // pred_fallthru
      _
    %p62 = scmp.eq.s32.totalorder 0, 0
    // Predicated region
    $region34: #{tpu_custom_call.1} parent=1 // pred_check
      %p63 = pneg %p62
    $region35: #{tpu_custom_call.1} parent=1 // pred_check_branch
      %65 = sbr.rel (%p63) target = $region37
    $region36: #{tpu_custom_call.1} parent=1 // pred_region
      %v66 = vld [vmem:[%s4] sm:$0x1]
      %v68 = vlaneseq
      %v69 = vshrl.u32 %v68, 7
      %v70 = vsub.s32 0, %v69
      %v71 = vrot.slane %v66, %v70
      %v73 = vadd.f32 %v71, 0.0
      %74 = vst [vmem:[#allocation8] sm:$0xff] %v73
      %75 = vst [vmem:[#allocation8 + $0x8] sm:$0xff] %v73
    $region37: #{tpu_custom_call.1} parent=1 // pred_fallthru
      _
    %v76 = vld [vmem:[#allocation2] sm:$0xff]
    %v77 = vld [vmem:[#allocation2 + $0x8] sm:$0xff]
    %v78 = vld [vmem:[#allocation5] sm:$0xff]
    %v79 = vld [vmem:[#allocation5 + $0x8] sm:$0xff]
    %v80 = vld [vmem:[#allocation5 + $0x10] sm:$0xff]
    %v81 = vld [vmem:[#allocation5 + $0x18] sm:$0xff]
    %v82 = vld [vmem:[#allocation5 + $0x20] sm:$0xff]
    %v83 = vld [vmem:[#allocation5 + $0x28] sm:$0xff]
    %v84 = vld [vmem:[#allocation5 + $0x30] sm:$0xff]
    %v85 = vld [vmem:[#allocation5 + $0x38] sm:$0xff]
    %v86 = vld [vmem:[#allocation5 + $0x40] sm:$0xff]
    %v87 = vld [vmem:[#allocation5 + $0x48] sm:$0xff]
    %v88 = vld [vmem:[#allocation5 + $0x50] sm:$0xff]
    %v89 = vld [vmem:[#allocation5 + $0x58] sm:$0xff]
    %v90 = vld [vmem:[#allocation5 + $0x60] sm:$0xff]
    %v91 = vld [vmem:[#allocation5 + $0x68] sm:$0xff]
    %v92 = vld [vmem:[#allocation5 + $0x70] sm:$0xff]
    %v93 = vld [vmem:[#allocation5 + $0x78] sm:$0xff]
    %v94 = vld [vmem:[#allocation5 + $0x80] sm:$0xff]
    %v95 = vld [vmem:[#allocation5 + $0x88] sm:$0xff]
    %v96 = vld [vmem:[#allocation5 + $0x90] sm:$0xff]
    %v97 = vld [vmem:[#allocation5 + $0x98] sm:$0xff]
    %v98 = vld [vmem:[#allocation5 + $0xa0] sm:$0xff]
    %v99 = vld [vmem:[#allocation5 + $0xa8] sm:$0xff]
    %v100 = vld [vmem:[#allocation5 + $0xb0] sm:$0xff]
    %v101 = vld [vmem:[#allocation5 + $0xb8] sm:$0xff]
    %v102 = vld [vmem:[#allocation5 + $0xc0] sm:$0xff]
    %v103 = vld [vmem:[#allocation5 + $0xc8] sm:$0xff]
    %v104 = vld [vmem:[#allocation5 + $0xd0] sm:$0xff]
    %v105 = vld [vmem:[#allocation5 + $0xd8] sm:$0xff]
    %v106 = vld [vmem:[#allocation5 + $0xe0] sm:$0xff]
    %v107 = vld [vmem:[#allocation5 + $0xe8] sm:$0xff]
    %v108 = vld [vmem:[#allocation5 + $0xf0] sm:$0xff]
    %v109 = vld [vmem:[#allocation5 + $0xf8] sm:$0xff]
    %v110 = vld [vmem:[%s2] sm:$0x3]
    %v112 = vlaneseq
    %v113 = vshrl.u32 %v112, 7
    %v114 = vsub.s32 0, %v113
    %v115 = vrot.slane %v110, %v114
    %v116 = vlaneseq
    %v117 = vshrl.u32 %v116, 7
    %v118 = vsub.s32 1, %v117
    %v119 = vrot.slane %v110, %v118
    %122 = vmatprep.subr.mxu0 %v79
    %123 = vmatpush1.msra.mxu0 %v78
    %124 = vmatprep.subr.mxu0 %v81
    %125 = vmatpush1.msra.mxu0 %v80
    %126 = vmatprep.subr.mxu0 %v83
    %127 = vmatpush1.msra.mxu0 %v82
    %128 = vmatprep.subr.mxu0 %v85
    %129 = vmatpush1.msra.mxu0 %v84
    %130 = vmatprep.subr.mxu0 %v87
    %131 = vmatpush1.msra.mxu0 %v86
    %132 = vmatprep.subr.mxu0 %v89
    %133 = vmatpush1.msra.mxu0 %v88
    %134 = vmatprep.subr.mxu0 %v91
    %135 = vmatpush1.msra.mxu0 %v90
    %136 = vmatprep.subr.mxu0 %v93
    %137 = vmatpush1.msra.mxu0 %v92
    %138 = vmatprep.subr.mxu0 %v95
    %139 = vmatpush1.msra.mxu0 %v94
    %140 = vmatprep.subr.mxu0 %v97
    %141 = vmatpush1.msra.mxu0 %v96
    %142 = vmatprep.subr.mxu0 %v99
    %143 = vmatpush1.msra.mxu0 %v98
    %144 = vmatprep.subr.mxu0 %v101
    %145 = vmatpush1.msra.mxu0 %v100
    %146 = vmatprep.subr.mxu0 %v103
    %147 = vmatpush1.msra.mxu0 %v102
    %148 = vmatprep.subr.mxu0 %v105
    %149 = vmatpush1.msra.mxu0 %v104
    %150 = vmatprep.subr.mxu0 %v107
    %151 = vmatpush1.msra.mxu0 %v106
    %152 = vmatprep.subr.mxu0 %v109
    %153 = vmatpush1.msra.mxu0 %v108
    %154 = vmatprep.subr.mxu0 0.0
    %155 = vmatpush1.msra.mxu0 0.0
    %156 = vmatprep.subr.mxu0 0.0
    %157 = vmatpush1.msra.mxu0 0.0
    %158 = vmatprep.subr.mxu0 0.0
    %159 = vmatpush1.msra.mxu0 0.0
    %160 = vmatprep.subr.mxu0 0.0
    %161 = vmatpush1.msra.mxu0 0.0
    %162 = vmatprep.subr.mxu0 0.0
    %163 = vmatpush1.msra.mxu0 0.0
    %164 = vmatprep.subr.mxu0 0.0
    %165 = vmatpush1.msra.mxu0 0.0
    %166 = vmatprep.subr.mxu0 0.0
    %167 = vmatpush1.msra.mxu0 0.0
    %168 = vmatprep.subr.mxu0 0.0
    %169 = vmatpush1.msra.mxu0 0.0
    %170 = vmatprep.subr.mxu0 0.0
    %171 = vmatpush1.msra.mxu0 0.0
    %172 = vmatprep.subr.mxu0 0.0
    %173 = vmatpush1.msra.mxu0 0.0
    %174 = vmatprep.subr.mxu0 0.0
    %175 = vmatpush1.msra.mxu0 0.0
    %176 = vmatprep.subr.mxu0 0.0
    %177 = vmatpush1.msra.mxu0 0.0
    %178 = vmatprep.subr.mxu0 0.0
    %179 = vmatpush1.msra.mxu0 0.0
    %180 = vmatprep.subr.mxu0 0.0
    %181 = vmatpush1.msra.mxu0 0.0
    %182 = vmatprep.subr.mxu0 0.0
    %183 = vmatpush1.msra.mxu0 0.0
    %184 = vmatprep.subr.mxu0 0.0
    %185 = vmatpush1.msra.mxu0 0.0
    %186 = vmatprep.mubr.f32.mxu0 0.0
    %187 = vmatmul.mubr.f32.gmra.mrb[0].mxu0 %v76
    %v188 = vpop.f32.mrb[0].mxu0
    %v189 = vadd.f32 %v115, %v188
    %v190 = vpop.f32.mrb[0].mxu0
    %v191 = vadd.f32 %v119, %v190
    %192 = vmatprep.mubr.f32.mxu0 0.0
    %193 = vmatmul.mubr.f32.gmra.mrb[0].mxu0 %v77
    %v194 = vpop.f32.mrb[0].mxu0
    %v195 = vadd.f32 %v115, %v194
    %v196 = vpop.f32.mrb[0].mxu0
    %v197 = vadd.f32 %v119, %v196
    %198 = vdwg.mxu0
    %v199 = vmul.f32 %v189, 0.5
    %v200 = vmul.f32 %v191, 0.5
    %v201 = vmul.f32 %v195, 0.5
    %v202 = vmul.f32 %v197, 0.5
    %v203 = vmul.f32 %v189, 0.044715
    %v204 = vmul.f32 %v191, 0.044715
    %v205 = vmul.f32 %v195, 0.044715
    %v206 = vmul.f32 %v197, 0.044715
    %v207 = vmul.f32 %v203, %v189
    %v208 = vmul.f32 %v204, %v191
    %v209 = vmul.f32 %v205, %v195
    %v210 = vmul.f32 %v206, %v197
    %v211 = vmul.f32 %v207, %v189
    %v212 = vmul.f32 %v208, %v191
    %v213 = vmul.f32 %v209, %v195
    %v214 = vmul.f32 %v210, %v197
    %v215 = vadd.f32 %v189, %v211
    %v216 = vadd.f32 %v191, %v212
    %v217 = vadd.f32 %v195, %v213
    %v218 = vadd.f32 %v197, %v214
    %v219 = vmul.f32 %v215, 0.7978846
    %v220 = vmul.f32 %v216, 0.7978846
    %v221 = vmul.f32 %v217, 0.7978846
    %v222 = vmul.f32 %v218, 0.7978846
    %v223 = vtanh.pop %v219
    %v224 = vtanh.pop %v220
    %v225 = vtanh.pop %v221
    %v226 = vtanh.pop %v222
    %v227 = vadd.f32 %v223, 1.0
    %v228 = vadd.f32 %v224, 1.0
    %v229 = vadd.f32 %v225, 1.0
    %v230 = vadd.f32 %v226, 1.0
    %v231 = vmul.f32 %v199, %v227
    %v232 = vmul.f32 %v200, %v228
    %v233 = vmul.f32 %v201, %v229
    %v234 = vmul.f32 %v202, %v230
    %v235 = vld [vmem:[#allocation8] sm:$0xff]
    %v236 = vld [vmem:[#allocation8 + $0x8] sm:$0xff]
    %v237 = vld [vmem:[#allocation7] sm:$0xff]
    %v238 = vld [vmem:[#allocation7 + $0x8] sm:$0xff]
    %v239 = vld [vmem:[#allocation7 + $0x10] sm:$0xff]
    %v240 = vld [vmem:[#allocation7 + $0x18] sm:$0xff]
    %v241 = vld [vmem:[#allocation7 + $0x20] sm:$0xff]
    %v242 = vld [vmem:[#allocation7 + $0x28] sm:$0xff]
    %v243 = vld [vmem:[#allocation7 + $0x30] sm:$0xff]
    %v244 = vld [vmem:[#allocation7 + $0x38] sm:$0xff]
    %v245 = vld [vmem:[#allocation7 + $0x40] sm:$0xff]
    %v246 = vld [vmem:[#allocation7 + $0x48] sm:$0xff]
    %v247 = vld [vmem:[#allocation7 + $0x50] sm:$0xff]
    %v248 = vld [vmem:[#allocation7 + $0x58] sm:$0xff]
    %v249 = vld [vmem:[#allocation7 + $0x60] sm:$0xff]
    %v250 = vld [vmem:[#allocation7 + $0x68] sm:$0xff]
    %v251 = vld [vmem:[#allocation7 + $0x70] sm:$0xff]
    %v252 = vld [vmem:[#allocation7 + $0x78] sm:$0xff]
    %v253 = vld [vmem:[#allocation7 + $0x80] sm:$0xff]
    %v254 = vld [vmem:[#allocation7 + $0x88] sm:$0xff]
    %v255 = vld [vmem:[#allocation7 + $0x90] sm:$0xff]
    %v256 = vld [vmem:[#allocation7 + $0x98] sm:$0xff]
    %v257 = vld [vmem:[#allocation7 + $0xa0] sm:$0xff]
    %v258 = vld [vmem:[#allocation7 + $0xa8] sm:$0xff]
    %v259 = vld [vmem:[#allocation7 + $0xb0] sm:$0xff]
    %v260 = vld [vmem:[#allocation7 + $0xb8] sm:$0xff]
    %v261 = vld [vmem:[#allocation7 + $0xc0] sm:$0xff]
    %v262 = vld [vmem:[#allocation7 + $0xc8] sm:$0xff]
    %v263 = vld [vmem:[#allocation7 + $0xd0] sm:$0xff]
    %v264 = vld [vmem:[#allocation7 + $0xd8] sm:$0xff]
    %v265 = vld [vmem:[#allocation7 + $0xe0] sm:$0xff]
    %v266 = vld [vmem:[#allocation7 + $0xe8] sm:$0xff]
    %v267 = vld [vmem:[#allocation7 + $0xf0] sm:$0xff]
    %v268 = vld [vmem:[#allocation7 + $0xf8] sm:$0xff]
    %269 = vmatprep.subr.mxu0 0.0
    %270 = vmatpush1.msra.mxu0 %v237
    %271 = vmatprep.subr.mxu0 0.0
    %272 = vmatpush1.msra.mxu0 %v238
    %273 = vmatprep.subr.mxu0 0.0
    %274 = vmatpush1.msra.mxu0 %v239
    %275 = vmatprep.subr.mxu0 0.0
    %276 = vmatpush1.msra.mxu0 %v240
    %277 = vmatprep.subr.mxu0 0.0
    %278 = vmatpush1.msra.mxu0 %v241
    %279 = vmatprep.subr.mxu0 0.0
    %280 = vmatpush1.msra.mxu0 %v242
    %281 = vmatprep.subr.mxu0 0.0
    %282 = vmatpush1.msra.mxu0 %v243
    %283 = vmatprep.subr.mxu0 0.0
    %284 = vmatpush1.msra.mxu0 %v244
    %285 = vmatprep.subr.mxu0 0.0
    %286 = vmatpush1.msra.mxu0 %v245
    %287 = vmatprep.subr.mxu0 0.0
    %288 = vmatpush1.msra.mxu0 %v246
    %289 = vmatprep.subr.mxu0 0.0
    %290 = vmatpush1.msra.mxu0 %v247
    %291 = vmatprep.subr.mxu0 0.0
    %292 = vmatpush1.msra.mxu0 %v248
    %293 = vmatprep.subr.mxu0 0.0
    %294 = vmatpush1.msra.mxu0 %v249
    %295 = vmatprep.subr.mxu0 0.0
    %296 = vmatpush1.msra.mxu0 %v250
    %297 = vmatprep.subr.mxu0 0.0
    %298 = vmatpush1.msra.mxu0 %v251
    %299 = vmatprep.subr.mxu0 0.0
    %300 = vmatpush1.msra.mxu0 %v252
    %301 = vmatprep.subr.mxu0 0.0
    %302 = vmatpush1.msra.mxu0 %v253
    %303 = vmatprep.subr.mxu0 0.0
    %304 = vmatpush1.msra.mxu0 %v254
    %305 = vmatprep.subr.mxu0 0.0
    %306 = vmatpush1.msra.mxu0 %v255
    %307 = vmatprep.subr.mxu0 0.0
    %308 = vmatpush1.msra.mxu0 %v256
    %309 = vmatprep.subr.mxu0 0.0
    %310 = vmatpush1.msra.mxu0 %v257
    %311 = vmatprep.subr.mxu0 0.0
    %312 = vmatpush1.msra.mxu0 %v258
    %313 = vmatprep.subr.mxu0 0.0
    %314 = vmatpush1.msra.mxu0 %v259
    %315 = vmatprep.subr.mxu0 0.0
    %316 = vmatpush1.msra.mxu0 %v260
    %317 = vmatprep.subr.mxu0 0.0
    %318 = vmatpush1.msra.mxu0 %v261
    %319 = vmatprep.subr.mxu0 0.0
    %320 = vmatpush1.msra.mxu0 %v262
    %321 = vmatprep.subr.mxu0 0.0
    %322 = vmatpush1.msra.mxu0 %v263
    %323 = vmatprep.subr.mxu0 0.0
    %324 = vmatpush1.msra.mxu0 %v264
    %325 = vmatprep.subr.mxu0 0.0
    %326 = vmatpush1.msra.mxu0 %v265
    %327 = vmatprep.subr.mxu0 0.0
    %328 = vmatpush1.msra.mxu0 %v266
    %329 = vmatprep.subr.mxu0 0.0
    %330 = vmatpush1.msra.mxu0 %v267
    %331 = vmatprep.subr.mxu0 0.0
    %332 = vmatpush1.msra.mxu0 %v268
    %333 = vmatprep.mubr.f32.mxu0 %v232
    %334 = vmatmul.mubr.f32.gmra.mrb[0].mxu0 %v231
    %v335 = vpop.f32.mrb[0].mxu0
    %v336 = vadd.f32 0.0, %v335
    %v337 = vpop.f32.mrb[0].mxu0
    %338 = vmatprep.mubr.f32.mxu0 %v234
    %339 = vmatmul.mubr.f32.gmra.mrb[0].mxu0 %v233
    %v340 = vpop.f32.mrb[0].mxu0
    %v341 = vadd.f32 0.0, %v340
    %v342 = vpop.f32.mrb[0].mxu0
    %343 = vdwg.mxu0
    %v344 = vadd.f32 %v235, %v336
    %v345 = vadd.f32 %v236, %v341
    %346 = vst [vmem:[#allocation8] sm:$0xff] %v344
    %347 = vst [vmem:[#allocation8 + $0x8] sm:$0xff] %v345
    // Predicated region
    $region38: #{tpu_custom_call.1} parent=1 // pred_check
      _
    $region39: #{tpu_custom_call.1} parent=1 // pred_check_branch
      %349 = sbr.rel (0) target = $region41
    $region40: #{tpu_custom_call.1} parent=1 // pred_region
      %s351 = ssub.s32 256, 256
      %352 = vsyncadd [#allocation4], %s351
      %s353 = sshll.u32 [#allocation8], 4
      %s354 = int_to_ptr.vmem [resolvable:$true] %s353
      %359 = dma.vmem_to_hbm [thread:$0]  %s354, 256, %s5, [#allocation4], 128, 128, 8
    $region41: #{tpu_custom_call.1} parent=1 // pred_fallthru
      _
    // Predicated region
    $region42: #{tpu_custom_call.1} parent=1 // pred_check
      _
    $region43: #{tpu_custom_call.1} parent=1 // pred_check_branch
      %361 = sbr.rel (0) target = $region45
    $region44: #{tpu_custom_call.1} parent=1 // pred_region
      %362 = dma.done [#allocation4], 256
    $region45: #{tpu_custom_call.1} parent=1 // pred_fallthru
      _
    %363 = vsyncpa [#allocation3], 1
    %364 = vsyncpa [#allocation6], 1
    %365 = vsyncpa [#allocation4], 1

</llo_original>
